<compile_context>
chip_gen: v5e
topology: v5e:2x2
jax: 0.10.0
libtpu: 0.0.40
codegen_flags: <defaults>
</compile_context>

<pallas_src>
import functools
import math

import jax
import jax.numpy as jnp
from jax.experimental import pallas as pl
from jax.experimental.pallas import tpu as pltpu


# ----------------------------- helpers ---------------------------------------

def _default(v, d):
    return v if v is not None else d


def _round_up(x: int, m: int) -> int:
    return ((x + m - 1) // m) * m


def _cdiv(a: int, b: int) -> int:
    return (a + b - 1) // b


def _vmem_budget_and_limit():
    """(tile working-set budget, vmem_limit_bytes) derived from chip VMEM."""
    cap = None
    try:
        info = pltpu.get_tpu_info()
        cap = int(getattr(info, "vmem_capacity_bytes", 0)) or None
    except Exception:
        cap = None
    if cap is None:
        cap = 64 * 1024 * 1024                      # conservative: v7x per-TC VMEM
    budget = min(cap // 2, 48 * 1024 * 1024)        # double-buffered tile budget
    limit = min(cap * 3 // 4, budget + 16 * 1024 * 1024)
    return budget, limit


_VMEM_BUDGET, _VMEM_LIMIT = _vmem_budget_and_limit()


def _choose_tiles(M, K, N, x_bytes, w_bytes, out_bytes, budget):
    """Pick (tm, tn, tk). K and N are multiples of 128 (weights pre-padded)."""
    tm = M if M <= 512 else 256                     # full-M block when small

    def cands(dim, extra):
        return [dim] + [t for t in extra if t < dim and dim % t == 0]

    tn_cands = cands(N, (1024, 512, 256, 128))
    tk_cands = cands(K, (2048, 1024, 512, 256, 128))

    def vmem_use(tm_, tn_, tk_):
        return (2 * tm_ * tk_ * x_bytes             # double-buffered activation tile
                + 2 * tk_ * tn_ * w_bytes           # double-buffered weight tile
                + 2 * tm_ * tn_ * out_bytes         # double-buffered output tile
                + tm_ * tn_ * 4)                    # f32 accumulator scratch

    choice = None
    for tn in tn_cands:                             # prefer the biggest tiles that fit
        for tk in tk_cands:
            if vmem_use(tm, tn, tk) <= budget:
                choice = (tn, tk)
                break
        if choice is not None:
            break
    if choice is None:
        tn, tk = 128, 128
        while tm > 8 and vmem_use(tm, tn, tk) > budget:
            tm = max(8, tm // 2)
    else:
        tn, tk = choice

    # v7x megacore balance: 1 or 3 parallel blocks leaves one TensorCore idle;
    # halving tn (still a multiple of 128 dividing N) evens the split.
    mb, nb = _cdiv(M, tm), N // tn
    if mb * nb in (1, 3) and tn % 256 == 0:
        tn //= 2
    return tm, tn, tk


def _prepare_weight(w, compute_dtype):
    """(out,in) nn.Linear weight -> pre-transposed, zero-padded (K_pad, N_pad)."""
    out_dim, in_dim = w.shape
    k_pad = _round_up(in_dim, 128)
    n_pad = _round_up(out_dim, 128)
    wt = jnp.zeros((k_pad, n_pad), compute_dtype)
    return wt.at[:in_dim, :out_dim].set(jnp.asarray(w).T.astype(compute_dtype))


# ----------------------------- Pallas kernel ---------------------------------

def _matmul_kernel(x_ref, wt_ref, o_ref, acc_ref, *, compute_dtype):
    # x_ref:  (tm, tk)  activation tile (native dtype, cast in-kernel)
    # wt_ref: (tk, tn)  pre-transposed bf16 weight tile
    # o_ref:  (tm, tn)  output tile (compute/out dtype)
    # acc_ref:(tm, tn)  f32 accumulator, persists across the K grid axis
    @pl.when(pl.program_id(2) == 0)
    def _init():
        acc_ref[...] = jnp.zeros_like(acc_ref)

    acc_ref[...] += jnp.dot(
        x_ref[...].astype(compute_dtype),
        wt_ref[...].astype(compute_dtype),
        preferred_element_type=jnp.float32,
    )

    @pl.when(pl.program_id(2) == pl.num_programs(2) - 1)
    def _store():
        o_ref[...] = acc_ref[...].astype(o_ref.dtype)


@functools.partial(
    jax.jit,
    static_argnames=("tm", "tn", "tk", "out_dim", "out_dtype",
                     "compute_dtype", "vmem_limit"))
def _linear_pallas(x2d, wt, *, tm, tn, tk, out_dim, out_dtype,
                   compute_dtype, vmem_limit):
    """x2d: (M, in_dim), wt: (K_pad, N_pad) -> (M, out_dim) in out_dtype."""
    M, in_dim = x2d.shape
    K_pad, N_pad = wt.shape
    if in_dim != K_pad:
        # Zero-pad K so padded activation columns hit zero weight rows.
        x2d = jnp.pad(x2d.astype(compute_dtype), ((0, 0), (0, K_pad - in_dim)))

    grid = (_cdiv(M, tm), N_pad // tn, K_pad // tk)
    flops = 2 * M * K_pad * N_pad
    bytes_accessed = (M * K_pad * x2d.dtype.itemsize
                      + K_pad * N_pad * wt.dtype.itemsize
                      + M * N_pad * jnp.dtype(out_dtype).itemsize)

    y = pl.pallas_call(
        functools.partial(_matmul_kernel, compute_dtype=compute_dtype),
        out_shape=jax.ShapeDtypeStruct((M, N_pad), out_dtype),
        grid_spec=pltpu.PrefetchScalarGridSpec(
            num_scalar_prefetch=0,
            grid=grid,
            in_specs=[
                pl.BlockSpec((tm, tk), lambda i, j, k: (i, k)),
                pl.BlockSpec((tk, tn), lambda i, j, k: (k, j)),
            ],
            out_specs=pl.BlockSpec((tm, tn), lambda i, j, k: (i, j)),
            scratch_shapes=[pltpu.VMEM((tm, tn), jnp.float32)],
        ),
        compiler_params=pltpu.CompilerParams(
            dimension_semantics=("parallel", "parallel", "arbitrary"),
            vmem_limit_bytes=vmem_limit,
        ),
        cost_estimate=pl.CostEstimate(
            flops=flops, bytes_accessed=bytes_accessed, transcendentals=0),
    )(x2d, wt)

    if out_dim != N_pad:
        y = y[:, :out_dim]
    return y


# ----------------------------- Module port -----------------------------------

class LinearAdapter:
    """JAX/Pallas port of the PyTorch LinearAdapter (bias-free q/k/v/out projections)."""

    def __init__(self, qry_dim: int, emb_dim: int,
                 key_dim=None, val_dim=None, *, key=None,
                 compute_dtype=jnp.bfloat16, out_dtype=None,
                 xla_fallback_max_rows: int = 0):
        key_dim = _default(key_dim, qry_dim)
        val_dim = _default(val_dim, key_dim)
        self.qry_dim, self.emb_dim = qry_dim, emb_dim
        self.key_dim, self.val_dim = key_dim, val_dim
        self.compute_dtype = compute_dtype
        # Outputs are written by the kernel directly in this dtype (bf16 by
        # default -> half the HBM writeback; acc stays f32).
        self.out_dtype = jnp.dtype(_default(out_dtype, compute_dtype))
        self.xla_fallback_max_rows = xla_fallback_max_rows

        if key is None:
            key = jax.random.PRNGKey(0)
        k_q, k_k, k_v, k_o = jax.random.split(key, 4)

        def init_w(k, out_dim, in_dim):
            bound = 1.0 / (in_dim ** 0.5)   # nn.Linear default U(-1/sqrt(in), 1/sqrt(in))
            return jax.random.uniform(k, (out_dim, in_dim), jnp.float32,
                                      minval=-bound, maxval=bound)

        # Reference (out, in) f32 weights, PyTorch layout.
        self.w_to_q = init_w(k_q, emb_dim, qry_dim)
        self.w_to_k = init_w(k_k, emb_dim, key_dim)
        self.w_to_v = init_w(k_v, emb_dim, val_dim)
        self.w_from_q = init_w(k_o, qry_dim, emb_dim)

        # Pre-transposed, zero-padded, compute-dtype weights (prepared ONCE).
        self._wt_q = _prepare_weight(self.w_to_q, compute_dtype)
        self._wt_k = _prepare_weight(self.w_to_k, compute_dtype)
        self._wt_v = _prepare_weight(self.w_to_v, compute_dtype)
        self._wt_o = _prepare_weight(self.w_from_q, compute_dtype)

        # Self-attention fast path: one (K_pad, 3*N_pad) weight, activation
        # streamed through HBM once when qry is key is val.
        if qry_dim == key_dim == val_dim:
            self._wt_qkv = jnp.concatenate([self._wt_q, self._wt_k, self._wt_v],
                                           axis=1)
            self._n_pad_qkv = self._wt_q.shape[1]
        else:
            self._wt_qkv = None
            self._n_pad_qkv = 0

    # -- single bias-free linear through the Pallas kernel ---------------------
    def _apply(self, x, wt, out_dim):
        lead = x.shape[:-1]
        in_dim = x.shape[-1]
        M = int(math.prod(lead)) if lead else 1
        K_pad, N_pad = wt.shape
        x2d = x.reshape(M, in_dim)

        if M <= self.xla_fallback_max_rows:
            # Tiny problems: pallas_call fixed cost dominates -> plain fused dot.
            y = jnp.dot(x2d.astype(self.compute_dtype), wt[:in_dim, :out_dim],
                        preferred_element_type=jnp.float32).astype(self.out_dtype)
            return y.reshape(*lead, out_dim)

        x_bytes = (jnp.dtype(self.compute_dtype).itemsize
                   if in_dim != K_pad else x2d.dtype.itemsize)
        tm, tn, tk = _choose_tiles(M, K_pad, N_pad, x_bytes,
                                   wt.dtype.itemsize, self.out_dtype.itemsize,
                                   _VMEM_BUDGET)
        y = _linear_pallas(x2d, wt, tm=tm, tn=tn, tk=tk, out_dim=out_dim,
                           out_dtype=self.out_dtype,
                           compute_dtype=self.compute_dtype,
                           vmem_limit=_VMEM_LIMIT)
        return y.reshape(*lead, out_dim)

    # -- forward ----------------------------------------------------------------
    def __call__(self, qry, key=None, val=None):
        if key is not None and val is not None:
            return self._proj_in(qry, key, val)
        return self._proj_out(qry)

    def _proj_in(self, qry, key, val):
        if self._wt_qkv is not None and (qry is key) and (key is val):
            lead = qry.shape[:-1]
            in_dim = qry.shape[-1]
            M = int(math.prod(lead)) if lead else 1
            x2d = qry.reshape(M, in_dim)
            K_pad, N3 = self._wt_qkv.shape
            x_bytes = (jnp.dtype(self.compute_dtype).itemsize
                       if in_dim != K_pad else x2d.dtype.itemsize)
            tm, tn, tk = _choose_tiles(M, K_pad, N3, x_bytes,
                                       self._wt_qkv.dtype.itemsize,
                                       self.out_dtype.itemsize, _VMEM_BUDGET)
            y = _linear_pallas(x2d, self._wt_qkv, tm=tm, tn=tn, tk=tk,
                               out_dim=N3, out_dtype=self.out_dtype,
                               compute_dtype=self.compute_dtype,
                               vmem_limit=_VMEM_LIMIT)
            e, npad = self.emb_dim, self._n_pad_qkv
            q = y[:, 0 * npad:0 * npad + e].reshape(*lead, e)
            k = y[:, 1 * npad:1 * npad + e].reshape(*lead, e)
            v = y[:, 2 * npad:2 * npad + e].reshape(*lead, e)
            return q, k, v

        q = self._apply(qry, self._wt_q, self.emb_dim)
        k = self._apply(key, self._wt_k, self.emb_dim)
        v = self._apply(val, self._wt_v, self.emb_dim)
        return q, k, v

    def _proj_out(self, qry):
        return self._apply(qry, self._wt_o, self.qry_dim)


# ----------------------------- Demo / check ----------------------------------

if __name__ == "__main__":
    B, S = 2, 64
    QRY_DIM = KEY_DIM = VAL_DIM = 128
    EMB_DIM = 256

    root = jax.random.PRNGKey(0)
    k_params, k_q, k_k, k_v = jax.random.split(root, 4)

    adapter = LinearAdapter(QRY_DIM, EMB_DIM, KEY_DIM, VAL_DIM, key=k_params)

    qry = jax.random.normal(k_q, (B, S, QRY_DIM), jnp.float32)
    key = jax.random.normal(k_k, (B, S, KEY_DIM), jnp.float32)
    val = jax.random.normal(k_v, (B, S, VAL_DIM), jnp.float32)

    # Path 1a: fused self-attention projection (single kernel call, concat weight).
    q_s, k_s, v_s = adapter(qry, qry, qry)
    # Path 1b: general projection with three distinct inputs.
    q, k, v = adapter(qry, key, val)
    # Path 2: output projection back to qry_dim.
    out = adapter(q)
    jax.block_until_ready((q_s, k_s, v_s, q, k, v, out))

    # Reference: same bf16-operand / f32-accumulation math with plain JAX dots.
    cd = adapter.compute_dtype
    od = adapter.out_dtype

    def ref_linear(x, w):
        y = jnp.dot(x.astype(cd), jnp.asarray(w).T.astype(cd),
                    preferred_element_type=jnp.float32)
        return y.astype(od)

    def close(a, b):
        return jnp.allclose(a.astype(jnp.float32), b.astype(jnp.float32),
                            atol=2e-2, rtol=2e-2)

    q_ref = ref_linear(qry, adapter.w_to_q)
    k_ref = ref_linear(key, adapter.w_to_k)
    v_ref = ref_linear(val, adapter.w_to_v)
    out_ref = ref_linear(q, adapter.w_from_q)

    assert q.shape == (B, S, EMB_DIM) and q.dtype == od
    assert k.shape == (B, S, EMB_DIM) and v.shape == (B, S, EMB_DIM)
    assert q_s.shape == (B, S, EMB_DIM) and k_s.shape == (B, S, EMB_DIM)
    assert v_s.shape == (B, S, EMB_DIM)
    assert out.shape == (B, S, QRY_DIM) and out.dtype == od

    assert close(q, q_ref)
    assert close(k, k_ref)
    assert close(v, v_ref)
    assert close(q_s, ref_linear(qry, adapter.w_to_q))
    assert close(k_s, ref_linear(qry, adapter.w_to_k))
    assert close(v_s, ref_linear(qry, adapter.w_to_v))
    assert close(out, out_ref)

    print("KERNEL_OK")
</pallas_src>

<mosaic_0001>
module attributes {stable_mosaic.version = 11 : i64} {
  func.func @_matmul_kernel(%arg0: i32, %arg1: i32, %arg2: i32, %arg3: memref<128x128xf32, #tpu.memory_space<vmem>>, %arg4: memref<128x384xbf16, #tpu.memory_space<vmem>>, %arg5: memref<128x384xbf16, #tpu.memory_space<vmem>>, %arg6: memref<128x384xf32, #tpu.memory_space<vmem>>) attributes {dimension_semantics = [#tpu.dimension_semantics<parallel>, #tpu.dimension_semantics<parallel>, #tpu.dimension_semantics<arbitrary>], iteration_bounds = array<i64: 1, 2, 1>, scalar_prefetch = 0 : i64, scratch_operands = 1 : i64, tpu.core_type = #tpu.core_type<tc>, window_params = [{transform_indices = @transform_0, window_bounds = array<i64: 128, 128>}, {transform_indices = @transform_1, window_bounds = array<i64: 128, 384>}, {transform_indices = @transform_2, window_bounds = array<i64: 128, 384>}]} {
    %c0_i32 = arith.constant 0 : i32
    %0 = arith.cmpi eq, %arg2, %c0_i32 : i32
    %1 = arith.extui %0 : i1 to i32
    %c0_i32_0 = arith.constant 0 : i32
    %2 = arith.cmpi ne, %1, %c0_i32_0 : i32
    scf.if %2 {
      %cst_10 = arith.constant 0.000000e+00 : f32
      %13 = vector.broadcast %cst_10 : f32 to vector<128x384xf32>
      %c0_11 = arith.constant 0 : index
      %c0_12 = arith.constant 0 : index
      %14 = vector.load %arg6[%c0_11, %c0_12] : memref<128x384xf32, #tpu.memory_space<vmem>>, vector<128x384xf32>
      tpu.vector_store %arg6[%c0_11, %c0_12], %13 {strides = array<i32>} : memref<128x384xf32, #tpu.memory_space<vmem>>, vector<128x384xf32>,
    } else {
    }
    %c0 = arith.constant 0 : index
    %c0_1 = arith.constant 0 : index
    %3 = vector.load %arg6[%c0, %c0_1] : memref<128x384xf32, #tpu.memory_space<vmem>>, vector<128x384xf32>
    %c0_2 = arith.constant 0 : index
    %c0_3 = arith.constant 0 : index
    %4 = vector.load %arg3[%c0_2, %c0_3] : memref<128x128xf32, #tpu.memory_space<vmem>>, vector<128x128xf32>
    %5 = arith.truncf %4 : vector<128x128xf32> to vector<128x128xbf16>
    %c0_4 = arith.constant 0 : index
    %c0_5 = arith.constant 0 : index
    %6 = vector.load %arg4[%c0_4, %c0_5] : memref<128x384xbf16, #tpu.memory_space<vmem>>, vector<128x384xbf16>
    %cst = arith.constant dense<0.000000e+00> : vector<128x384xf32>
    %7 = tpu.matmul %5, %6, %cst {dimension_numbers = #tpu.dot_dimension_numbers<[1], [0], [0], [1], [0, 0, 1, 1], [], []>} : vector<128x128xbf16>, vector<128x384xbf16>, vector<128x384xf32> -> vector<128x384xf32>
    %8 = arith.addf %3, %7 : vector<128x384xf32>
    %c0_6 = arith.constant 0 : index
    %c0_7 = arith.constant 0 : index
    %9 = vector.load %arg6[%c0_6, %c0_7] : memref<128x384xf32, #tpu.memory_space<vmem>>, vector<128x384xf32>
    tpu.vector_store %arg6[%c0_6, %c0_7], %8 {strides = array<i32>} : memref<128x384xf32, #tpu.memory_space<vmem>>, vector<128x384xf32>,
    %c0_i32_8 = arith.constant 0 : i32
    %10 = arith.cmpi eq, %arg2, %c0_i32_8 : i32
    %11 = arith.extui %10 : i1 to i32
    %c0_i32_9 = arith.constant 0 : i32
    %12 = arith.cmpi ne, %11, %c0_i32_9 : i32
    scf.if %12 {
      %c0_10 = arith.constant 0 : index
      %c0_11 = arith.constant 0 : index
      %13 = vector.load %arg6[%c0_10, %c0_11] : memref<128x384xf32, #tpu.memory_space<vmem>>, vector<128x384xf32>
      %14 = arith.truncf %13 : vector<128x384xf32> to vector<128x384xbf16>
      %c0_12 = arith.constant 0 : index
      %c0_13 = arith.constant 0 : index
      %15 = vector.load %arg5[%c0_12, %c0_13] : memref<128x384xbf16, #tpu.memory_space<vmem>>, vector<128x384xbf16>
      tpu.vector_store %arg5[%c0_12, %c0_13], %14 {strides = array<i32>} : memref<128x384xbf16, #tpu.memory_space<vmem>>, vector<128x384xbf16>,
    } else {
    }
    return
  }
  func.func @transform_0(%arg0: i32, %arg1: i32, %arg2: i32) -> (i32, i32) {
    %c0_i32 = arith.constant 0 : i32
    return %arg0, %arg2 : i32, i32
  }
  func.func @transform_1(%arg0: i32, %arg1: i32, %arg2: i32) -> (i32, i32) {
    %c0_i32 = arith.constant 0 : i32
    return %arg2, %arg1 : i32, i32
  }
  func.func @transform_2(%arg0: i32, %arg1: i32, %arg2: i32) -> (i32, i32) {
    %c0_i32 = arith.constant 0 : i32
    return %arg0, %arg1 : i32, i32
  }
}

</mosaic_0001>

<llo_original>
// kernel: _linear_pallas.1
$region0: #{_linear_pallas.1}
  #allocation0 [shape = 'u32[]', space=smem, size = 0x4, offset = 0x4, fixed_abs, tag = 'smem constant byte address 0x4 - core index']
  #allocation1 [shape = 'u32[72,128]{1,0:T(1,128)}', space=vmem, size = 0x9000, scoped, tag = 'internal scratch']
  #allocation2 [shape = 'f32[128,384]{1,0:T(8,128)}', space=vmem, size = 0x30000, scoped, tag = 'scratch operand']
  %s0 = inlined_call_operand.hbm [shape: f32[128,128], index: 0, kind: input, shape index: {}]
  %s1 = inlined_call_operand.hbm [shape: bf16[128,768], index: 1, kind: input, shape index: {}]
  %s2 = inlined_call_operand.hbm [shape: bf16[128,768], index: 2, kind: output, shape index: {}]
  %s3 = sld [smem:[#allocation0]]
  $region57: #{_linear_pallas.1} parent=0
    _
  %s5 = ssub.s32 1, %s3
  %s6 = scalar_select 0, %s5, %s3
  $region1: #{_linear_pallas.1} parent=0
    #allocation3 [shape = 'u8[65536]{0}', space=vmem, size = 0x10000, scoped, tag = 'input window, operand 0, single buffered']
    #allocation4 [shape = 's32[2]{0}', space=sflag, size = 0x8, scoped, tag = 'scoped memory for _linear_pallas.1']
    #allocation5 [shape = 's32[2]{0}', space=sflag, size = 0x8, scoped, tag = 'scoped memory for _linear_pallas.1']
    #allocation6 [shape = 'u8[196608]{0}', space=vmem, size = 0x30000, scoped, tag = 'input window, operand 1']
    #allocation7 [shape = 's32[2]{0}', space=sflag, size = 0x8, scoped, tag = 'scoped memory for _linear_pallas.1']
    #allocation8 [shape = 'u8[196608]{0}', space=vmem, size = 0x30000, scoped, tag = 'output window, operand 0']
    %7 = vsyncpa [#allocation4], 0
    %8 = vsyncpa [#allocation7], 0
    %s9 = scalar_lea.sflag [#allocation7], 1
    %10 = vsyncpa %s9, 0
    %11 = vsyncpa [#allocation5], 0
    %s12 = scalar_lea.sflag [#allocation5], 1
    %13 = vsyncpa %s12, 0
    loop: start=0, step=1, limit=4
    $region2: #{_linear_pallas.1} parent=1 // loop_pre_header
      _
    $region3: #{_linear_pallas.1} parent=1 // loop_header
      %s15 = sphi 0, %s19
      %p16 = scmp.ge.s32.totalorder %s15, 4
      %s22 = sphi 0, %s41
      %s23 = sphi 0, %s37
      %s24 = sphi 0, %s33
      %s25 = sphi 0, %s22
      %s26 = sphi 0, %s23
      %s27 = sphi 0, %s24
      %s28 = sphi 0, %s25
      %s29 = sphi 0, %s26
      %s30 = sphi 0, %s27
      %s46 = sphi 0, %s48
      %s49 = sphi 0, %s46
      %s50 = sphi 0, %s49
      %s66 = sphi 0, %s50
      %s74 = sphi 0, %s76
      %s77 = sphi 0, %s74
      %s78 = sphi 0, %s77
      %s94 = sphi 0, %s78
      %s102 = sphi 0, %s104
      %s105 = sphi 0, %s102
      %s106 = sphi 0, %s105
      %s122 = sphi 0, %s106
    $region4: #{_linear_pallas.1} parent=1 // loop_header_branch
      %18 = sbr.rel (%p16) target = $region8
    $region5: #{_linear_pallas.1} parent=1 // loop_body
      %s20 = ssub.s32 %s15, 1
      %s21 = ssub.s32 %s15, 2
      %s31 = sadd.s32 1, %s24
      %p32 = scmp.ge.s32.totalorder %s31, 1
      %s33 = scalar_select %p32, 0, %s31
      %s34 = sadd.s32 1, %s23
      %s35 = scalar_select %p32, %s34, %s23
      %p36 = scmp.ge.s32.totalorder %s35, 2
      %s37 = scalar_select %p36, 0, %s35
      %s38 = sadd.s32 1, %s22
      %s39 = scalar_select %p36, %s38, %s22
      %p40 = scmp.ge.s32.totalorder %s39, 1
      %s41 = scalar_select %p40, 0, %s39
      %s42 = ssub.s32 %s22, %s41
      %s43 = ssub.s32 %s24, %s33
      %s44 = sor.u32 %s42, %s43
      %p45 = scmp.eq.s32.totalorder %s44, 0
      %s47 = sadd.s32 %s46, 1
      %s48 = scalar_select %p45, %s46, %s47
      %p51 = pneg %p45
      %p52 = scmp.eq.s32.totalorder %s15, 1
      %p53 = por %p51, %p52
      %p54 = scmp.ne.s32.totalorder %s46, %s49
      %p55 = scmp.eq.s32.totalorder %s15, 0
      %p56 = por %p54, %p55
      %p57 = scmp.ne.s32.totalorder %s46, %s49
      %p58 = scmp.eq.s32.totalorder %s20, 1
      %p59 = por %p57, %p58
      %p60 = scmp.ne.s32.totalorder %s49, %s50
      %p61 = scmp.eq.s32.totalorder %s20, 0
      %p62 = por %p60, %p61
      %p63 = scmp.ne.s32.totalorder %s49, %s50
      %p64 = scmp.eq.s32.totalorder %s21, 1
      %p65 = por %p63, %p64
      %p67 = scmp.ne.s32.totalorder %s50, %s66
      %p68 = scmp.eq.s32.totalorder %s21, 0
      %p69 = por %p67, %p68
      %s70 = ssub.s32 %s24, %s33
      %s71 = ssub.s32 %s23, %s37
      %s72 = sor.u32 %s70, %s71
      %p73 = scmp.eq.s32.totalorder %s72, 0
      %s75 = sadd.s32 %s74, 1
      %s76 = scalar_select %p73, %s74, %s75
      %p79 = pneg %p73
      %p80 = scmp.eq.s32.totalorder %s15, 1
      %p81 = por %p79, %p80
      %p82 = scmp.ne.s32.totalorder %s74, %s77
      %p83 = scmp.eq.s32.totalorder %s15, 0
      %p84 = por %p82, %p83
      %p85 = scmp.ne.s32.totalorder %s74, %s77
      %p86 = scmp.eq.s32.totalorder %s20, 1
      %p87 = por %p85, %p86
      %p88 = scmp.ne.s32.totalorder %s77, %s78
      %p89 = scmp.eq.s32.totalorder %s20, 0
      %p90 = por %p88, %p89
      %p91 = scmp.ne.s32.totalorder %s77, %s78
      %p92 = scmp.eq.s32.totalorder %s21, 1
      %p93 = por %p91, %p92
      %p95 = scmp.ne.s32.totalorder %s78, %s94
      %p96 = scmp.eq.s32.totalorder %s21, 0
      %p97 = por %p95, %p96
      %s98 = ssub.s32 %s22, %s41
      %s99 = ssub.s32 %s23, %s37
      %s100 = sor.u32 %s98, %s99
      %p101 = scmp.eq.s32.totalorder %s100, 0
      %s103 = sadd.s32 %s102, 1
      %s104 = scalar_select %p101, %s102, %s103
      %p107 = pneg %p101
      %p108 = scmp.eq.s32.totalorder %s15, 1
      %p109 = por %p107, %p108
      %p110 = scmp.ne.s32.totalorder %s102, %s105
      %p111 = scmp.eq.s32.totalorder %s15, 0
      %p112 = por %p110, %p111
      %p113 = scmp.ne.s32.totalorder %s102, %s105
      %p114 = scmp.eq.s32.totalorder %s20, 1
      %p115 = por %p113, %p114
      %p116 = scmp.ne.s32.totalorder %s105, %s106
      %p117 = scmp.eq.s32.totalorder %s20, 0
      %p118 = por %p116, %p117
      %p119 = scmp.ne.s32.totalorder %s105, %s106
      %p120 = scmp.eq.s32.totalorder %s21, 1
      %p121 = por %p119, %p120
      %p123 = scmp.ne.s32.totalorder %s106, %s122
      %p124 = scmp.eq.s32.totalorder %s21, 0
      %p125 = por %p123, %p124
      %p126 = scmp.le.s32.totalorder 1, %s15
      %p127 = scmp.lt.s32.totalorder %s15, 3
      %p128 = pnand %p126, %p127
      %p129 = pneg %p128
      // Predicated region
      $region9: #{_linear_pallas.1} parent=5 // pred_check
        _
      $region10: #{_linear_pallas.1} parent=5 // pred_check_branch
        %131 = sbr.rel (%p128) target = $region12
      $region11: #{_linear_pallas.1} parent=5 // pred_region
        %s132 = ssub.s32 %s15, 1
        // Predicated region
        $region13: #{_linear_pallas.1} parent=11 // pred_check
          %p133 = pneg %p62
        $region14: #{_linear_pallas.1} parent=11 // pred_check_branch
          %135 = sbr.rel (%p133) target = $region16
        $region15: #{_linear_pallas.1} parent=11 // pred_region
          %s136 = smul.u32 16, %s25
          %138 = vsyncadd [#allocation4], 0
          %s139 = sadd.s32 %s27, %s136
          %s140 = smul.addr %s139, 8
          %s141 = scalar_lea.hbm %s0, %s140
          %s142 = sshll.u32 %s141, 4
          %s143 = int_to_ptr.hbm [resolvable:$true] %s142
          %s144 = sshll.u32 [#allocation3], 4
          %s145 = int_to_ptr.vmem [resolvable:$true] %s144
          %150 = dma.hbm_to_vmem [thread:$0]  %s143, 2048, %s145, [#allocation4], 128, 128, 8
        $region16: #{_linear_pallas.1} parent=11 // pred_fallthru
          _
      $region12: #{_linear_pallas.1} parent=5 // pred_fallthru
        _
      %p151 = scmp.lt.s32.totalorder %s15, 2
      // Predicated region
      $region17: #{_linear_pallas.1} parent=5 // pred_check
        %p152 = pneg %p151
      $region18: #{_linear_pallas.1} parent=5 // pred_check_branch
        %154 = sbr.rel (%p152) target = $region20
      $region19: #{_linear_pallas.1} parent=5 // pred_region
        // Predicated region
        $region21: #{_linear_pallas.1} parent=19 // pred_check
          %p155 = pneg %p84
        $region22: #{_linear_pallas.1} parent=19 // pred_check_branch
          %157 = sbr.rel (%p155) target = $region24
        $region23: #{_linear_pallas.1} parent=19 // pred_region
          %s158 = sand.u32 %s74, 1
          %s159 = scalar_lea.sflag [#allocation7], %s158
          %s160 = sand.u32 %s74, 1
          %s161 = smul.addr %s160, 192
          %s162 = scalar_lea.vmem [#allocation6], %s161
          %s163 = smul.u32 16, %s24
          %s164 = smul.u32 3, %s23
          %166 = vsyncadd %s159, 0
          %s167 = smul.addr %s163, 6
          %s168 = sadd.s32 %s164, %s167
          %s169 = smul.addr %s168, 4
          %s170 = scalar_lea.hbm %s1, %s169
          %s171 = sshll.u32 %s170, 4
          %s172 = int_to_ptr.hbm [resolvable:$true] %s171
          %s173 = sshll.u32 %s162, 4
          %s174 = int_to_ptr.vmem [resolvable:$true] %s173
          %179 = dma.hbm_to_vmem [thread:$0]  %s172, 3072, %s174, %s159, 384, 192, 12
        $region24: #{_linear_pallas.1} parent=19 // pred_fallthru
          _
      $region20: #{_linear_pallas.1} parent=5 // pred_fallthru
        _
      %p180 = scmp.le.s32.totalorder 1, %s15
      %p181 = scmp.lt.s32.totalorder %s15, 3
      %p182 = pnand %p180, %p181
      %p183 = pneg %p182
      // Predicated region
      $region25: #{_linear_pallas.1} parent=5 // pred_check
        _
      $region26: #{_linear_pallas.1} parent=5 // pred_check_branch
        %185 = sbr.rel (%p182) target = $region28
      $region27: #{_linear_pallas.1} parent=5 // pred_region
        %s186 = ssub.s32 %s15, 1
        // Predicated region
        $region29: #{_linear_pallas.1} parent=27 // pred_check
          %p187 = pneg %p62
        $region30: #{_linear_pallas.1} parent=27 // pred_check_branch
          %189 = sbr.rel (%p187) target = $region32
        $region31: #{_linear_pallas.1} parent=27 // pred_region
          %191 = dma.done [#allocation4], 2048
        $region32: #{_linear_pallas.1} parent=27 // pred_fallthru
          _
        %s192 = sand.u32 %s77, 1
        %s193 = scalar_lea.sflag [#allocation7], %s192
        %s194 = sand.u32 %s77, 1
        %s195 = smul.addr %s194, 192
        %s196 = scalar_lea.vmem [#allocation6], %s195
        // Predicated region
        $region33: #{_linear_pallas.1} parent=27 // pred_check
          %p197 = pneg %p90
        $region34: #{_linear_pallas.1} parent=27 // pred_check_branch
          %199 = sbr.rel (%p197) target = $region36
        $region35: #{_linear_pallas.1} parent=27 // pred_region
          %201 = dma.done %s193, 3072
        $region36: #{_linear_pallas.1} parent=27 // pred_fallthru
          _
        %p202 = pneg %p62
        %p203 = pneg %p59
        %s204 = sand.u32 %s77, 1
        %s205 = scalar_lea.sflag [#allocation7], %s204
        %s206 = sand.u32 %s77, 1
        %s207 = smul.addr %s206, 192
        %s208 = scalar_lea.vmem [#allocation6], %s207
        %p209 = pneg %p90
        %p210 = pneg %p87
        %p211 = pneg %p118
        %p212 = pneg %p115
        %s213 = sand.u32 %s105, 1
        %s214 = scalar_lea.sflag [#allocation5], %s213
        %s215 = sand.u32 %s105, 1
        %s216 = smul.addr %s215, 192
        %s217 = scalar_lea.vmem [#allocation8], %s216
        %s218 = smul.u32 16, %s25
        %s219 = smul.u32 16, %s27
        %s220 = smul.u32 3, %s26
        %s221 = smul.u32 16, %s25
        %s222 = smul.u32 3, %s26
        %p223 = scmp.eq.s32.totalorder %s27, 0
        // Predicated region
        $region37: #{_linear_pallas.1} parent=27 // pred_check
          %p224 = pneg %p223
        $region38: #{_linear_pallas.1} parent=27 // pred_check_branch
          %226 = sbr.rel (%p224) target = $region40
        $region39: #{_linear_pallas.1} parent=27 // pred_region
          %227 = vst [vmem:[#allocation2] sm:$0xff] 0.0
          %228 = vst [vmem:[#allocation2 + $0x8] sm:$0xff] 0.0
          %229 = vst [vmem:[#allocation2 + $0x10] sm:$0xff] 0.0
          %230 = vst [vmem:[#allocation2 + $0x18] sm:$0xff] 0.0
          %231 = vst [vmem:[#allocation2 + $0x20] sm:$0xff] 0.0
          %232 = vst [vmem:[#allocation2 + $0x28] sm:$0xff] 0.0
          %233 = vst [vmem:[#allocation2 + $0x30] sm:$0xff] 0.0
          %234 = vst [vmem:[#allocation2 + $0x38] sm:$0xff] 0.0
          %235 = vst [vmem:[#allocation2 + $0x40] sm:$0xff] 0.0
          %236 = vst [vmem:[#allocation2 + $0x48] sm:$0xff] 0.0
          %237 = vst [vmem:[#allocation2 + $0x50] sm:$0xff] 0.0
          %238 = vst [vmem:[#allocation2 + $0x58] sm:$0xff] 0.0
          %239 = vst [vmem:[#allocation2 + $0x60] sm:$0xff] 0.0
          %240 = vst [vmem:[#allocation2 + $0x68] sm:$0xff] 0.0
          %241 = vst [vmem:[#allocation2 + $0x70] sm:$0xff] 0.0
          %242 = vst [vmem:[#allocation2 + $0x78] sm:$0xff] 0.0
          %243 = vst [vmem:[#allocation2 + $0x80] sm:$0xff] 0.0
          %244 = vst [vmem:[#allocation2 + $0x88] sm:$0xff] 0.0
          %245 = vst [vmem:[#allocation2 + $0x90] sm:$0xff] 0.0
          %246 = vst [vmem:[#allocation2 + $0x98] sm:$0xff] 0.0
          %247 = vst [vmem:[#allocation2 + $0xa0] sm:$0xff] 0.0
          %248 = vst [vmem:[#allocation2 + $0xa8] sm:$0xff] 0.0
          %249 = vst [vmem:[#allocation2 + $0xb0] sm:$0xff] 0.0
          %250 = vst [vmem:[#allocation2 + $0xb8] sm:$0xff] 0.0
          %251 = vst [vmem:[#allocation2 + $0xc0] sm:$0xff] 0.0
          %252 = vst [vmem:[#allocation2 + $0xc8] sm:$0xff] 0.0
          %253 = vst [vmem:[#allocation2 + $0xd0] sm:$0xff] 0.0
          %254 = vst [vmem:[#allocation2 + $0xd8] sm:$0xff] 0.0
          %255 = vst [vmem:[#allocation2 + $0xe0] sm:$0xff] 0.0
          %256 = vst [vmem:[#allocation2 + $0xe8] sm:$0xff] 0.0
          %257 = vst [vmem:[#allocation2 + $0xf0] sm:$0xff] 0.0
          %258 = vst [vmem:[#allocation2 + $0xf8] sm:$0xff] 0.0
          %259 = vst [vmem:[#allocation2 + $0x100] sm:$0xff] 0.0
          %260 = vst [vmem:[#allocation2 + $0x108] sm:$0xff] 0.0
          %261 = vst [vmem:[#allocation2 + $0x110] sm:$0xff] 0.0
          %262 = vst [vmem:[#allocation2 + $0x118] sm:$0xff] 0.0
          %263 = vst [vmem:[#allocation2 + $0x120] sm:$0xff] 0.0
          %264 = vst [vmem:[#allocation2 + $0x128] sm:$0xff] 0.0
          %265 = vst [vmem:[#allocation2 + $0x130] sm:$0xff] 0.0
          %266 = vst [vmem:[#allocation2 + $0x138] sm:$0xff] 0.0
          %267 = vst [vmem:[#allocation2 + $0x140] sm:$0xff] 0.0
          %268 = vst [vmem:[#allocation2 + $0x148] sm:$0xff] 0.0
          %269 = vst [vmem:[#allocation2 + $0x150] sm:$0xff] 0.0
          %270 = vst [vmem:[#allocation2 + $0x158] sm:$0xff] 0.0
          %271 = vst [vmem:[#allocation2 + $0x160] sm:$0xff] 0.0
          %272 = vst [vmem:[#allocation2 + $0x168] sm:$0xff] 0.0
          %273 = vst [vmem:[#allocation2 + $0x170] sm:$0xff] 0.0
          %274 = vst [vmem:[#allocation2 + $0x178] sm:$0xff] 0.0
        $region40: #{_linear_pallas.1} parent=27 // pred_fallthru
          _
        %v275 = vld [vmem:[#allocation2] sm:$0xff]
        %v276 = vld [vmem:[#allocation2 + $0x8] sm:$0xff]
        %v277 = vld [vmem:[#allocation2 + $0x10] sm:$0xff]
        %v278 = vld [vmem:[#allocation2 + $0x18] sm:$0xff]
        %v279 = vld [vmem:[#allocation2 + $0x20] sm:$0xff]
        %v280 = vld [vmem:[#allocation2 + $0x28] sm:$0xff]
        %v281 = vld [vmem:[#allocation2 + $0x30] sm:$0xff]
        %v282 = vld [vmem:[#allocation2 + $0x38] sm:$0xff]
        %v283 = vld [vmem:[#allocation2 + $0x40] sm:$0xff]
        %v284 = vld [vmem:[#allocation2 + $0x48] sm:$0xff]
        %v285 = vld [vmem:[#allocation2 + $0x50] sm:$0xff]
        %v286 = vld [vmem:[#allocation2 + $0x58] sm:$0xff]
        %v287 = vld [vmem:[#allocation2 + $0x60] sm:$0xff]
        %v288 = vld [vmem:[#allocation2 + $0x68] sm:$0xff]
        %v289 = vld [vmem:[#allocation2 + $0x70] sm:$0xff]
        %v290 = vld [vmem:[#allocation2 + $0x78] sm:$0xff]
        %v291 = vld [vmem:[#allocation2 + $0x80] sm:$0xff]
        %v292 = vld [vmem:[#allocation2 + $0x88] sm:$0xff]
        %v293 = vld [vmem:[#allocation2 + $0x90] sm:$0xff]
        %v294 = vld [vmem:[#allocation2 + $0x98] sm:$0xff]
        %v295 = vld [vmem:[#allocation2 + $0xa0] sm:$0xff]
        %v296 = vld [vmem:[#allocation2 + $0xa8] sm:$0xff]
        %v297 = vld [vmem:[#allocation2 + $0xb0] sm:$0xff]
        %v298 = vld [vmem:[#allocation2 + $0xb8] sm:$0xff]
        %v299 = vld [vmem:[#allocation2 + $0xc0] sm:$0xff]
        %v300 = vld [vmem:[#allocation2 + $0xc8] sm:$0xff]
        %v301 = vld [vmem:[#allocation2 + $0xd0] sm:$0xff]
        %v302 = vld [vmem:[#allocation2 + $0xd8] sm:$0xff]
        %v303 = vld [vmem:[#allocation2 + $0xe0] sm:$0xff]
        %v304 = vld [vmem:[#allocation2 + $0xe8] sm:$0xff]
        %v305 = vld [vmem:[#allocation2 + $0xf0] sm:$0xff]
        %v306 = vld [vmem:[#allocation2 + $0xf8] sm:$0xff]
        %v307 = vld [vmem:[#allocation2 + $0x100] sm:$0xff]
        %v308 = vld [vmem:[#allocation2 + $0x108] sm:$0xff]
        %v309 = vld [vmem:[#allocation2 + $0x110] sm:$0xff]
        %v310 = vld [vmem:[#allocation2 + $0x118] sm:$0xff]
        %v311 = vld [vmem:[#allocation2 + $0x120] sm:$0xff]
        %v312 = vld [vmem:[#allocation2 + $0x128] sm:$0xff]
        %v313 = vld [vmem:[#allocation2 + $0x130] sm:$0xff]
        %v314 = vld [vmem:[#allocation2 + $0x138] sm:$0xff]
        %v315 = vld [vmem:[#allocation2 + $0x140] sm:$0xff]
        %v316 = vld [vmem:[#allocation2 + $0x148] sm:$0xff]
        %v317 = vld [vmem:[#allocation2 + $0x150] sm:$0xff]
        %v318 = vld [vmem:[#allocation2 + $0x158] sm:$0xff]
        %v319 = vld [vmem:[#allocation2 + $0x160] sm:$0xff]
        %v320 = vld [vmem:[#allocation2 + $0x168] sm:$0xff]
        %v321 = vld [vmem:[#allocation2 + $0x170] sm:$0xff]
        %v322 = vld [vmem:[#allocation2 + $0x178] sm:$0xff]
        %v323 = vld [vmem:[#allocation3] sm:$0xff]
        %v324 = vld [vmem:[#allocation3 + $0x8] sm:$0xff]
        %v325 = vld [vmem:[#allocation3 + $0x10] sm:$0xff]
        %v326 = vld [vmem:[#allocation3 + $0x18] sm:$0xff]
        %v327 = vld [vmem:[#allocation3 + $0x20] sm:$0xff]
        %v328 = vld [vmem:[#allocation3 + $0x28] sm:$0xff]
        %v329 = vld [vmem:[#allocation3 + $0x30] sm:$0xff]
        %v330 = vld [vmem:[#allocation3 + $0x38] sm:$0xff]
        %v331 = vld [vmem:[#allocation3 + $0x40] sm:$0xff]
        %v332 = vld [vmem:[#allocation3 + $0x48] sm:$0xff]
        %v333 = vld [vmem:[#allocation3 + $0x50] sm:$0xff]
        %v334 = vld [vmem:[#allocation3 + $0x58] sm:$0xff]
        %v335 = vld [vmem:[#allocation3 + $0x60] sm:$0xff]
        %v336 = vld [vmem:[#allocation3 + $0x68] sm:$0xff]
        %v337 = vld [vmem:[#allocation3 + $0x70] sm:$0xff]
        %v338 = vld [vmem:[#allocation3 + $0x78] sm:$0xff]
        %v339 = vpack.c.bf16 %v324, %v323
        %v340 = vpack.c.bf16 %v326, %v325
        %v341 = vpack.c.bf16 %v328, %v327
        %v342 = vpack.c.bf16 %v330, %v329
        %v343 = vpack.c.bf16 %v332, %v331
        %v344 = vpack.c.bf16 %v334, %v333
        %v345 = vpack.c.bf16 %v336, %v335
        %v346 = vpack.c.bf16 %v338, %v337
        %v347 = vld [vmem:[%s196] sm:$0xff]
        %v348 = vld [vmem:[%s196 + $0x8] sm:$0xf]
        %v349 = vld [vmem:[%s196 + $0xc] sm:$0xff]
        %v350 = vld [vmem:[%s196 + $0x14] sm:$0xf]
        %v351 = vld [vmem:[%s196 + $0x18] sm:$0xff]
        %v352 = vld [vmem:[%s196 + $0x20] sm:$0xf]
        %v353 = vld [vmem:[%s196 + $0x24] sm:$0xff]
        %v354 = vld [vmem:[%s196 + $0x2c] sm:$0xf]
        %v355 = vld [vmem:[%s196 + $0x30] sm:$0xff]
        %v356 = vld [vmem:[%s196 + $0x38] sm:$0xf]
        %v357 = vld [vmem:[%s196 + $0x3c] sm:$0xff]
        %v358 = vld [vmem:[%s196 + $0x44] sm:$0xf]
        %v359 = vld [vmem:[%s196 + $0x48] sm:$0xff]
        %v360 = vld [vmem:[%s196 + $0x50] sm:$0xf]
        %v361 = vld [vmem:[%s196 + $0x54] sm:$0xff]
        %v362 = vld [vmem:[%s196 + $0x5c] sm:$0xf]
        %v363 = vld [vmem:[%s196 + $0x60] sm:$0xff]
        %v364 = vld [vmem:[%s196 + $0x68] sm:$0xf]
        %v365 = vld [vmem:[%s196 + $0x6c] sm:$0xff]
        %v366 = vld [vmem:[%s196 + $0x74] sm:$0xf]
        %v367 = vld [vmem:[%s196 + $0x78] sm:$0xff]
        %v368 = vld [vmem:[%s196 + $0x80] sm:$0xf]
        %v369 = vld [vmem:[%s196 + $0x84] sm:$0xff]
        %v370 = vld [vmem:[%s196 + $0x8c] sm:$0xf]
        %v371 = vld [vmem:[%s196 + $0x90] sm:$0xff]
        %v372 = vld [vmem:[%s196 + $0x98] sm:$0xf]
        %v373 = vld [vmem:[%s196 + $0x9c] sm:$0xff]
        %v374 = vld [vmem:[%s196 + $0xa4] sm:$0xf]
        %v375 = vld [vmem:[%s196 + $0xa8] sm:$0xff]
        %v376 = vld [vmem:[%s196 + $0xb0] sm:$0xf]
        %v377 = vld [vmem:[%s196 + $0xb4] sm:$0xff]
        %v378 = vld [vmem:[%s196 + $0xbc] sm:$0xf]
        %v411 = vunpack.c.l.b16 %v347
        %v412 = vunpack.c.h.b16 %v347
        %v413 = vunpack.c.l.b16 %v348
        %v414 = vunpack.c.l.b16 %v349
        %v415 = vunpack.c.h.b16 %v349
        %v416 = vunpack.c.l.b16 %v350
        %v417 = vunpack.c.l.b16 %v351
        %v418 = vunpack.c.h.b16 %v351
        %v419 = vunpack.c.l.b16 %v352
        %v420 = vunpack.c.l.b16 %v353
        %v421 = vunpack.c.h.b16 %v353
        %v422 = vunpack.c.l.b16 %v354
        %v423 = vunpack.c.l.b16 %v355
        %v424 = vunpack.c.h.b16 %v355
        %v425 = vunpack.c.l.b16 %v356
        %v426 = vunpack.c.l.b16 %v357
        %v427 = vunpack.c.h.b16 %v357
        %v428 = vunpack.c.l.b16 %v358
        %v429 = vunpack.c.l.b16 %v359
        %v430 = vunpack.c.h.b16 %v359
        %v431 = vunpack.c.l.b16 %v360
        %v432 = vunpack.c.l.b16 %v361
        %v433 = vunpack.c.h.b16 %v361
        %v434 = vunpack.c.l.b16 %v362
        %v435 = vunpack.c.l.b16 %v363
        %v436 = vunpack.c.h.b16 %v363
        %v437 = vunpack.c.l.b16 %v364
        %v438 = vunpack.c.l.b16 %v365
        %v439 = vunpack.c.h.b16 %v365
        %v440 = vunpack.c.l.b16 %v366
        %v441 = vunpack.c.l.b16 %v367
        %v442 = vunpack.c.h.b16 %v367
        %v443 = vunpack.c.l.b16 %v368
        %v444 = vunpack.c.l.b16 %v369
        %v445 = vunpack.c.h.b16 %v369
        %v446 = vunpack.c.l.b16 %v370
        %v447 = vunpack.c.l.b16 %v371
        %v448 = vunpack.c.h.b16 %v371
        %v449 = vunpack.c.l.b16 %v372
        %v450 = vunpack.c.l.b16 %v373
        %v451 = vunpack.c.h.b16 %v373
        %v452 = vunpack.c.l.b16 %v374
        %v453 = vunpack.c.l.b16 %v375
        %v454 = vunpack.c.h.b16 %v375
        %v455 = vunpack.c.l.b16 %v376
        %v456 = vunpack.c.l.b16 %v377
        %v457 = vunpack.c.h.b16 %v377
        %v458 = vunpack.c.l.b16 %v378
        %v459 = vpack.c.b16 %v414, %v411
        %v460 = vpack.c.b16 %v415, %v412
        %v461 = vpack.c.b16 %v416, %v413
        %v462 = vpack.c.b16 %v420, %v417
        %v463 = vpack.c.b16 %v421, %v418
        %v464 = vpack.c.b16 %v422, %v419
        %v465 = vpack.c.b16 %v426, %v423
        %v466 = vpack.c.b16 %v427, %v424
        %v467 = vpack.c.b16 %v428, %v425
        %v468 = vpack.c.b16 %v432, %v429
        %v469 = vpack.c.b16 %v433, %v430
        %v470 = vpack.c.b16 %v434, %v431
        %v471 = vpack.c.b16 %v438, %v435
        %v472 = vpack.c.b16 %v439, %v436
        %v473 = vpack.c.b16 %v440, %v437
        %v474 = vpack.c.b16 %v444, %v441
        %v475 = vpack.c.b16 %v445, %v442
        %v476 = vpack.c.b16 %v446, %v443
        %v477 = vpack.c.b16 %v450, %v447
        %v478 = vpack.c.b16 %v451, %v448
        %v479 = vpack.c.b16 %v452, %v449
        %v480 = vpack.c.b16 %v456, %v453
        %v481 = vpack.c.b16 %v457, %v454
        %v482 = vpack.c.b16 %v458, %v455
        %507 = vmatpush.bf16.msra.mxu0 %v480
        %508 = vmatpush.bf16.msra.mxu0 %v477
        %509 = vmatpush.bf16.msra.mxu0 %v474
        %510 = vmatpush.bf16.msra.mxu0 %v471
        %511 = vmatpush.bf16.msra.mxu0 %v468
        %512 = vmatpush.bf16.msra.mxu0 %v465
        %513 = vmatpush.bf16.msra.mxu0 %v462
        %514 = vmatpush.bf16.msra.mxu0 %v459
        %515 = vmatmul.bf16.gmra.mxu0 %v339
        %v516 = vpop.f32.mrf.mxu0
        %v517 = vadd.f32 0.0, %v516
        %v518 = vpop.f32.mrf.mxu0
        %v519 = vadd.f32 0.0, %v518
        %520 = vmatmul.bf16.gmra.mxu0 %v340
        %v521 = vpop.f32.mrf.mxu0
        %v522 = vadd.f32 0.0, %v521
        %v523 = vpop.f32.mrf.mxu0
        %v524 = vadd.f32 0.0, %v523
        %525 = vmatmul.bf16.gmra.mxu0 %v341
        %v526 = vpop.f32.mrf.mxu0
        %v527 = vadd.f32 0.0, %v526
        %v528 = vpop.f32.mrf.mxu0
        %v529 = vadd.f32 0.0, %v528
        %530 = vmatmul.bf16.gmra.mxu0 %v342
        %v531 = vpop.f32.mrf.mxu0
        %v532 = vadd.f32 0.0, %v531
        %v533 = vpop.f32.mrf.mxu0
        %v534 = vadd.f32 0.0, %v533
        %535 = vmatmul.bf16.gmra.mxu0 %v343
        %v536 = vpop.f32.mrf.mxu0
        %v537 = vadd.f32 0.0, %v536
        %v538 = vpop.f32.mrf.mxu0
        %v539 = vadd.f32 0.0, %v538
        %540 = vmatmul.bf16.gmra.mxu0 %v344
        %v541 = vpop.f32.mrf.mxu0
        %v542 = vadd.f32 0.0, %v541
        %v543 = vpop.f32.mrf.mxu0
        %v544 = vadd.f32 0.0, %v543
        %545 = vmatmul.bf16.gmra.mxu0 %v345
        %v546 = vpop.f32.mrf.mxu0
        %v547 = vadd.f32 0.0, %v546
        %v548 = vpop.f32.mrf.mxu0
        %v549 = vadd.f32 0.0, %v548
        %550 = vmatmul.bf16.gmra.mxu0 %v346
        %v551 = vpop.f32.mrf.mxu0
        %v552 = vadd.f32 0.0, %v551
        %v553 = vpop.f32.mrf.mxu0
        %v554 = vadd.f32 0.0, %v553
        %555 = vdwg.mxu0
        %556 = vmatpush.bf16.msra.mxu0 %v481
        %557 = vmatpush.bf16.msra.mxu0 %v478
        %558 = vmatpush.bf16.msra.mxu0 %v475
        %559 = vmatpush.bf16.msra.mxu0 %v472
        %560 = vmatpush.bf16.msra.mxu0 %v469
        %561 = vmatpush.bf16.msra.mxu0 %v466
        %562 = vmatpush.bf16.msra.mxu0 %v463
        %563 = vmatpush.bf16.msra.mxu0 %v460
        %564 = vmatmul.bf16.gmra.mxu0 %v339
        %v565 = vpop.f32.mrf.mxu0
        %v566 = vadd.f32 0.0, %v565
        %v567 = vpop.f32.mrf.mxu0
        %v568 = vadd.f32 0.0, %v567
        %569 = vmatmul.bf16.gmra.mxu0 %v340
        %v570 = vpop.f32.mrf.mxu0
        %v571 = vadd.f32 0.0, %v570
        %v572 = vpop.f32.mrf.mxu0
        %v573 = vadd.f32 0.0, %v572
        %574 = vmatmul.bf16.gmra.mxu0 %v341
        %v575 = vpop.f32.mrf.mxu0
        %v576 = vadd.f32 0.0, %v575
        %v577 = vpop.f32.mrf.mxu0
        %v578 = vadd.f32 0.0, %v577
        %579 = vmatmul.bf16.gmra.mxu0 %v342
        %v580 = vpop.f32.mrf.mxu0
        %v581 = vadd.f32 0.0, %v580
        %v582 = vpop.f32.mrf.mxu0
        %v583 = vadd.f32 0.0, %v582
        %584 = vmatmul.bf16.gmra.mxu0 %v343
        %v585 = vpop.f32.mrf.mxu0
        %v586 = vadd.f32 0.0, %v585
        %v587 = vpop.f32.mrf.mxu0
        %v588 = vadd.f32 0.0, %v587
        %589 = vmatmul.bf16.gmra.mxu0 %v344
        %v590 = vpop.f32.mrf.mxu0
        %v591 = vadd.f32 0.0, %v590
        %v592 = vpop.f32.mrf.mxu0
        %v593 = vadd.f32 0.0, %v592
        %594 = vmatmul.bf16.gmra.mxu0 %v345
        %v595 = vpop.f32.mrf.mxu0
        %v596 = vadd.f32 0.0, %v595
        %v597 = vpop.f32.mrf.mxu0
        %v598 = vadd.f32 0.0, %v597
        %599 = vmatmul.bf16.gmra.mxu0 %v346
        %v600 = vpop.f32.mrf.mxu0
        %v601 = vadd.f32 0.0, %v600
        %v602 = vpop.f32.mrf.mxu0
        %v603 = vadd.f32 0.0, %v602
        %604 = vdwg.mxu0
        %605 = vmatpush.bf16.msra.mxu0 %v482
        %606 = vmatpush.bf16.msra.mxu0 %v479
        %607 = vmatpush.bf16.msra.mxu0 %v476
        %608 = vmatpush.bf16.msra.mxu0 %v473
        %609 = vmatpush.bf16.msra.mxu0 %v470
        %610 = vmatpush.bf16.msra.mxu0 %v467
        %611 = vmatpush.bf16.msra.mxu0 %v464
        %612 = vmatpush.bf16.msra.mxu0 %v461
        %613 = vmatmul.bf16.gmra.mxu0 %v339
        %v614 = vpop.f32.mrf.mxu0
        %v615 = vadd.f32 0.0, %v614
        %v616 = vpop.f32.mrf.mxu0
        %v617 = vadd.f32 0.0, %v616
        %618 = vmatmul.bf16.gmra.mxu0 %v340
        %v619 = vpop.f32.mrf.mxu0
        %v620 = vadd.f32 0.0, %v619
        %v621 = vpop.f32.mrf.mxu0
        %v622 = vadd.f32 0.0, %v621
        %623 = vmatmul.bf16.gmra.mxu0 %v341
        %v624 = vpop.f32.mrf.mxu0
        %v625 = vadd.f32 0.0, %v624
        %v626 = vpop.f32.mrf.mxu0
        %v627 = vadd.f32 0.0, %v626
        %628 = vmatmul.bf16.gmra.mxu0 %v342
        %v629 = vpop.f32.mrf.mxu0
        %v630 = vadd.f32 0.0, %v629
        %v631 = vpop.f32.mrf.mxu0
        %v632 = vadd.f32 0.0, %v631
        %633 = vmatmul.bf16.gmra.mxu0 %v343
        %v634 = vpop.f32.mrf.mxu0
        %v635 = vadd.f32 0.0, %v634
        %v636 = vpop.f32.mrf.mxu0
        %v637 = vadd.f32 0.0, %v636
        %638 = vmatmul.bf16.gmra.mxu0 %v344
        %v639 = vpop.f32.mrf.mxu0
        %v640 = vadd.f32 0.0, %v639
        %v641 = vpop.f32.mrf.mxu0
        %v642 = vadd.f32 0.0, %v641
        %643 = vmatmul.bf16.gmra.mxu0 %v345
        %v644 = vpop.f32.mrf.mxu0
        %v645 = vadd.f32 0.0, %v644
        %v646 = vpop.f32.mrf.mxu0
        %v647 = vadd.f32 0.0, %v646
        %648 = vmatmul.bf16.gmra.mxu0 %v346
        %v649 = vpop.f32.mrf.mxu0
        %v650 = vadd.f32 0.0, %v649
        %v651 = vpop.f32.mrf.mxu0
        %v652 = vadd.f32 0.0, %v651
        %653 = vdwg.mxu0
        %v654 = vadd.f32 %v275, %v517
        %v655 = vadd.f32 %v276, %v566
        %v656 = vadd.f32 %v277, %v615
        %v657 = vadd.f32 %v278, %v519
        %v658 = vadd.f32 %v279, %v568
        %v659 = vadd.f32 %v280, %v617
        %v660 = vadd.f32 %v281, %v522
        %v661 = vadd.f32 %v282, %v571
        %v662 = vadd.f32 %v283, %v620
        %v663 = vadd.f32 %v284, %v524
        %v664 = vadd.f32 %v285, %v573
        %v665 = vadd.f32 %v286, %v622
        %v666 = vadd.f32 %v287, %v527
        %v667 = vadd.f32 %v288, %v576
        %v668 = vadd.f32 %v289, %v625
        %v669 = vadd.f32 %v290, %v529
        %v670 = vadd.f32 %v291, %v578
        %v671 = vadd.f32 %v292, %v627
        %v672 = vadd.f32 %v293, %v532
        %v673 = vadd.f32 %v294, %v581
        %v674 = vadd.f32 %v295, %v630
        %v675 = vadd.f32 %v296, %v534
        %v676 = vadd.f32 %v297, %v583
        %v677 = vadd.f32 %v298, %v632
        %v678 = vadd.f32 %v299, %v537
        %v679 = vadd.f32 %v300, %v586
        %v680 = vadd.f32 %v301, %v635
        %v681 = vadd.f32 %v302, %v539
        %v682 = vadd.f32 %v303, %v588
        %v683 = vadd.f32 %v304, %v637
        %v684 = vadd.f32 %v305, %v542
        %v685 = vadd.f32 %v306, %v591
        %v686 = vadd.f32 %v307, %v640
        %v687 = vadd.f32 %v308, %v544
        %v688 = vadd.f32 %v309, %v593
        %v689 = vadd.f32 %v310, %v642
        %v690 = vadd.f32 %v311, %v547
        %v691 = vadd.f32 %v312, %v596
        %v692 = vadd.f32 %v313, %v645
        %v693 = vadd.f32 %v314, %v549
        %v694 = vadd.f32 %v315, %v598
        %v695 = vadd.f32 %v316, %v647
        %v696 = vadd.f32 %v317, %v552
        %v697 = vadd.f32 %v318, %v601
        %v698 = vadd.f32 %v319, %v650
        %v699 = vadd.f32 %v320, %v554
        %v700 = vadd.f32 %v321, %v603
        %v701 = vadd.f32 %v322, %v652
        %702 = vst [vmem:[#allocation2] sm:$0xff] %v654
        %703 = vst [vmem:[#allocation2 + $0x8] sm:$0xff] %v655
        %704 = vst [vmem:[#allocation2 + $0x10] sm:$0xff] %v656
        %705 = vst [vmem:[#allocation2 + $0x18] sm:$0xff] %v657
        %706 = vst [vmem:[#allocation2 + $0x20] sm:$0xff] %v658
        %707 = vst [vmem:[#allocation2 + $0x28] sm:$0xff] %v659
        %708 = vst [vmem:[#allocation2 + $0x30] sm:$0xff] %v660
        %709 = vst [vmem:[#allocation2 + $0x38] sm:$0xff] %v661
        %710 = vst [vmem:[#allocation2 + $0x40] sm:$0xff] %v662
        %711 = vst [vmem:[#allocation2 + $0x48] sm:$0xff] %v663
        %712 = vst [vmem:[#allocation2 + $0x50] sm:$0xff] %v664
        %713 = vst [vmem:[#allocation2 + $0x58] sm:$0xff] %v665
        %714 = vst [vmem:[#allocation2 + $0x60] sm:$0xff] %v666
        %715 = vst [vmem:[#allocation2 + $0x68] sm:$0xff] %v667
        %716 = vst [vmem:[#allocation2 + $0x70] sm:$0xff] %v668
        %717 = vst [vmem:[#allocation2 + $0x78] sm:$0xff] %v669
        %718 = vst [vmem:[#allocation2 + $0x80] sm:$0xff] %v670
        %719 = vst [vmem:[#allocation2 + $0x88] sm:$0xff] %v671
        %720 = vst [vmem:[#allocation2 + $0x90] sm:$0xff] %v672
        %721 = vst [vmem:[#allocation2 + $0x98] sm:$0xff] %v673
        %722 = vst [vmem:[#allocation2 + $0xa0] sm:$0xff] %v674
        %723 = vst [vmem:[#allocation2 + $0xa8] sm:$0xff] %v675
        %724 = vst [vmem:[#allocation2 + $0xb0] sm:$0xff] %v676
        %725 = vst [vmem:[#allocation2 + $0xb8] sm:$0xff] %v677
        %726 = vst [vmem:[#allocation2 + $0xc0] sm:$0xff] %v678
        %727 = vst [vmem:[#allocation2 + $0xc8] sm:$0xff] %v679
        %728 = vst [vmem:[#allocation2 + $0xd0] sm:$0xff] %v680
        %729 = vst [vmem:[#allocation2 + $0xd8] sm:$0xff] %v681
        %730 = vst [vmem:[#allocation2 + $0xe0] sm:$0xff] %v682
        %731 = vst [vmem:[#allocation2 + $0xe8] sm:$0xff] %v683
        %732 = vst [vmem:[#allocation2 + $0xf0] sm:$0xff] %v684
        %733 = vst [vmem:[#allocation2 + $0xf8] sm:$0xff] %v685
        %734 = vst [vmem:[#allocation2 + $0x100] sm:$0xff] %v686
        %735 = vst [vmem:[#allocation2 + $0x108] sm:$0xff] %v687
        %736 = vst [vmem:[#allocation2 + $0x110] sm:$0xff] %v688
        %737 = vst [vmem:[#allocation2 + $0x118] sm:$0xff] %v689
        %738 = vst [vmem:[#allocation2 + $0x120] sm:$0xff] %v690
        %739 = vst [vmem:[#allocation2 + $0x128] sm:$0xff] %v691
        %740 = vst [vmem:[#allocation2 + $0x130] sm:$0xff] %v692
        %741 = vst [vmem:[#allocation2 + $0x138] sm:$0xff] %v693
        %742 = vst [vmem:[#allocation2 + $0x140] sm:$0xff] %v694
        %743 = vst [vmem:[#allocation2 + $0x148] sm:$0xff] %v695
        %744 = vst [vmem:[#allocation2 + $0x150] sm:$0xff] %v696
        %745 = vst [vmem:[#allocation2 + $0x158] sm:$0xff] %v697
        %746 = vst [vmem:[#allocation2 + $0x160] sm:$0xff] %v698
        %747 = vst [vmem:[#allocation2 + $0x168] sm:$0xff] %v699
        %748 = vst [vmem:[#allocation2 + $0x170] sm:$0xff] %v700
        %749 = vst [vmem:[#allocation2 + $0x178] sm:$0xff] %v701
        // Predicated region
        $region41: #{_linear_pallas.1} parent=27 // pred_check
          %p750 = pneg %p223
        $region42: #{_linear_pallas.1} parent=27 // pred_check_branch
          %752 = sbr.rel (%p750) target = $region44
        $region43: #{_linear_pallas.1} parent=27 // pred_region
          %v753 = vld [vmem:[#allocation2] sm:$0xff]
          %v754 = vld [vmem:[#allocation2 + $0x8] sm:$0xff]
          %v755 = vld [vmem:[#allocation2 + $0x10] sm:$0xff]
          %v756 = vld [vmem:[#allocation2 + $0x18] sm:$0xff]
          %v757 = vld [vmem:[#allocation2 + $0x20] sm:$0xff]
          %v758 = vld [vmem:[#allocation2 + $0x28] sm:$0xff]
          %v759 = vld [vmem:[#allocation2 + $0x30] sm:$0xff]
          %v760 = vld [vmem:[#allocation2 + $0x38] sm:$0xff]
          %v761 = vld [vmem:[#allocation2 + $0x40] sm:$0xff]
          %v762 = vld [vmem:[#allocation2 + $0x48] sm:$0xff]
          %v763 = vld [vmem:[#allocation2 + $0x50] sm:$0xff]
          %v764 = vld [vmem:[#allocation2 + $0x58] sm:$0xff]
          %v765 = vld [vmem:[#allocation2 + $0x60] sm:$0xff]
          %v766 = vld [vmem:[#allocation2 + $0x68] sm:$0xff]
          %v767 = vld [vmem:[#allocation2 + $0x70] sm:$0xff]
          %v768 = vld [vmem:[#allocation2 + $0x78] sm:$0xff]
          %v769 = vld [vmem:[#allocation2 + $0x80] sm:$0xff]
          %v770 = vld [vmem:[#allocation2 + $0x88] sm:$0xff]
          %v771 = vld [vmem:[#allocation2 + $0x90] sm:$0xff]
          %v772 = vld [vmem:[#allocation2 + $0x98] sm:$0xff]
          %v773 = vld [vmem:[#allocation2 + $0xa0] sm:$0xff]
          %v774 = vld [vmem:[#allocation2 + $0xa8] sm:$0xff]
          %v775 = vld [vmem:[#allocation2 + $0xb0] sm:$0xff]
          %v776 = vld [vmem:[#allocation2 + $0xb8] sm:$0xff]
          %v777 = vld [vmem:[#allocation2 + $0xc0] sm:$0xff]
          %v778 = vld [vmem:[#allocation2 + $0xc8] sm:$0xff]
          %v779 = vld [vmem:[#allocation2 + $0xd0] sm:$0xff]
          %v780 = vld [vmem:[#allocation2 + $0xd8] sm:$0xff]
          %v781 = vld [vmem:[#allocation2 + $0xe0] sm:$0xff]
          %v782 = vld [vmem:[#allocation2 + $0xe8] sm:$0xff]
          %v783 = vld [vmem:[#allocation2 + $0xf0] sm:$0xff]
          %v784 = vld [vmem:[#allocation2 + $0xf8] sm:$0xff]
          %v785 = vld [vmem:[#allocation2 + $0x100] sm:$0xff]
          %v786 = vld [vmem:[#allocation2 + $0x108] sm:$0xff]
          %v787 = vld [vmem:[#allocation2 + $0x110] sm:$0xff]
          %v788 = vld [vmem:[#allocation2 + $0x118] sm:$0xff]
          %v789 = vld [vmem:[#allocation2 + $0x120] sm:$0xff]
          %v790 = vld [vmem:[#allocation2 + $0x128] sm:$0xff]
          %v791 = vld [vmem:[#allocation2 + $0x130] sm:$0xff]
          %v792 = vld [vmem:[#allocation2 + $0x138] sm:$0xff]
          %v793 = vld [vmem:[#allocation2 + $0x140] sm:$0xff]
          %v794 = vld [vmem:[#allocation2 + $0x148] sm:$0xff]
          %v795 = vld [vmem:[#allocation2 + $0x150] sm:$0xff]
          %v796 = vld [vmem:[#allocation2 + $0x158] sm:$0xff]
          %v797 = vld [vmem:[#allocation2 + $0x160] sm:$0xff]
          %v798 = vld [vmem:[#allocation2 + $0x168] sm:$0xff]
          %v799 = vld [vmem:[#allocation2 + $0x170] sm:$0xff]
          %v800 = vld [vmem:[#allocation2 + $0x178] sm:$0xff]
          %v801 = vpack.c.bf16 %v754, %v753
          %v802 = vpack.c.bf16 %v755, %v755
          %v803 = vpack.c.bf16 %v757, %v756
          %v804 = vpack.c.bf16 %v758, %v758
          %v805 = vpack.c.bf16 %v760, %v759
          %v806 = vpack.c.bf16 %v761, %v761
          %v807 = vpack.c.bf16 %v763, %v762
          %v808 = vpack.c.bf16 %v764, %v764
          %v809 = vpack.c.bf16 %v766, %v765
          %v810 = vpack.c.bf16 %v767, %v767
          %v811 = vpack.c.bf16 %v769, %v768
          %v812 = vpack.c.bf16 %v770, %v770
          %v813 = vpack.c.bf16 %v772, %v771
          %v814 = vpack.c.bf16 %v773, %v773
          %v815 = vpack.c.bf16 %v775, %v774
          %v816 = vpack.c.bf16 %v776, %v776
          %v817 = vpack.c.bf16 %v778, %v777
          %v818 = vpack.c.bf16 %v779, %v779
          %v819 = vpack.c.bf16 %v781, %v780
          %v820 = vpack.c.bf16 %v782, %v782
          %v821 = vpack.c.bf16 %v784, %v783
          %v822 = vpack.c.bf16 %v785, %v785
          %v823 = vpack.c.bf16 %v787, %v786
          %v824 = vpack.c.bf16 %v788, %v788
          %v825 = vpack.c.bf16 %v790, %v789
          %v826 = vpack.c.bf16 %v791, %v791
          %v827 = vpack.c.bf16 %v793, %v792
          %v828 = vpack.c.bf16 %v794, %v794
          %v829 = vpack.c.bf16 %v796, %v795
          %v830 = vpack.c.bf16 %v797, %v797
          %v831 = vpack.c.bf16 %v799, %v798
          %v832 = vpack.c.bf16 %v800, %v800
          %833 = vst [vmem:[%s217] sm:$0xff] %v801
          %834 = vst [vmem:[%s217 + $0x8] sm:$0xf] %v802
          %835 = vst [vmem:[%s217 + $0xc] sm:$0xff] %v803
          %836 = vst [vmem:[%s217 + $0x14] sm:$0xf] %v804
          %837 = vst [vmem:[%s217 + $0x18] sm:$0xff] %v805
          %838 = vst [vmem:[%s217 + $0x20] sm:$0xf] %v806
          %839 = vst [vmem:[%s217 + $0x24] sm:$0xff] %v807
          %840 = vst [vmem:[%s217 + $0x2c] sm:$0xf] %v808
          %841 = vst [vmem:[%s217 + $0x30] sm:$0xff] %v809
          %842 = vst [vmem:[%s217 + $0x38] sm:$0xf] %v810
          %843 = vst [vmem:[%s217 + $0x3c] sm:$0xff] %v811
          %844 = vst [vmem:[%s217 + $0x44] sm:$0xf] %v812
          %845 = vst [vmem:[%s217 + $0x48] sm:$0xff] %v813
          %846 = vst [vmem:[%s217 + $0x50] sm:$0xf] %v814
          %847 = vst [vmem:[%s217 + $0x54] sm:$0xff] %v815
          %848 = vst [vmem:[%s217 + $0x5c] sm:$0xf] %v816
          %849 = vst [vmem:[%s217 + $0x60] sm:$0xff] %v817
          %850 = vst [vmem:[%s217 + $0x68] sm:$0xf] %v818
          %851 = vst [vmem:[%s217 + $0x6c] sm:$0xff] %v819
          %852 = vst [vmem:[%s217 + $0x74] sm:$0xf] %v820
          %853 = vst [vmem:[%s217 + $0x78] sm:$0xff] %v821
          %854 = vst [vmem:[%s217 + $0x80] sm:$0xf] %v822
          %855 = vst [vmem:[%s217 + $0x84] sm:$0xff] %v823
          %856 = vst [vmem:[%s217 + $0x8c] sm:$0xf] %v824
          %857 = vst [vmem:[%s217 + $0x90] sm:$0xff] %v825
          %858 = vst [vmem:[%s217 + $0x98] sm:$0xf] %v826
          %859 = vst [vmem:[%s217 + $0x9c] sm:$0xff] %v827
          %860 = vst [vmem:[%s217 + $0xa4] sm:$0xf] %v828
          %861 = vst [vmem:[%s217 + $0xa8] sm:$0xff] %v829
          %862 = vst [vmem:[%s217 + $0xb0] sm:$0xf] %v830
          %863 = vst [vmem:[%s217 + $0xb4] sm:$0xff] %v831
          %864 = vst [vmem:[%s217 + $0xbc] sm:$0xf] %v832
        $region44: #{_linear_pallas.1} parent=27 // pred_fallthru
          _
        %s865 = sand.u32 %s105, 1
        %s866 = scalar_lea.sflag [#allocation5], %s865
        %s867 = sand.u32 %s105, 1
        %s868 = smul.addr %s867, 192
        %s869 = scalar_lea.vmem [#allocation8], %s868
        // Predicated region
        $region45: #{_linear_pallas.1} parent=27 // pred_check
          %p870 = pneg %p115
        $region46: #{_linear_pallas.1} parent=27 // pred_check_branch
          %872 = sbr.rel (%p870) target = $region48
        $region47: #{_linear_pallas.1} parent=27 // pred_region
          %s873 = smul.u32 16, %s25
          %s874 = smul.u32 3, %s26
          %876 = vsyncadd %s866, 0
          %s877 = smul.addr %s873, 6
          %s878 = sadd.s32 %s874, %s877
          %s879 = smul.addr %s878, 4
          %s880 = scalar_lea.hbm %s2, %s879
          %s881 = sshll.u32 %s869, 4
          %s882 = int_to_ptr.vmem [resolvable:$true] %s881
          %s883 = sshll.u32 %s880, 4
          %s884 = int_to_ptr.hbm [resolvable:$true] %s883
          %889 = dma.vmem_to_hbm [thread:$0]  %s882, 3072, %s884, %s866, 192, 384, 12
        $region48: #{_linear_pallas.1} parent=27 // pred_fallthru
          _
      $region28: #{_linear_pallas.1} parent=5 // pred_fallthru
        _
      %p890 = scmp.le.s32.totalorder 2, %s15
      // Predicated region
      $region49: #{_linear_pallas.1} parent=5 // pred_check
        %p891 = pneg %p890
      $region50: #{_linear_pallas.1} parent=5 // pred_check_branch
        %893 = sbr.rel (%p891) target = $region52
      $region51: #{_linear_pallas.1} parent=5 // pred_region
        %s894 = ssub.s32 %s15, 2
        // Predicated region
        $region53: #{_linear_pallas.1} parent=51 // pred_check
          %p895 = pneg %p121
        $region54: #{_linear_pallas.1} parent=51 // pred_check_branch
          %897 = sbr.rel (%p895) target = $region56
        $region55: #{_linear_pallas.1} parent=51 // pred_region
          %s898 = sand.u32 %s106, 1
          %s899 = scalar_lea.sflag [#allocation5], %s898
          %s900 = sand.u32 %s106, 1
          %s901 = smul.addr %s900, 192
          %s902 = scalar_lea.vmem [#allocation8], %s901
          %904 = dma.done %s899, 3072
        $region56: #{_linear_pallas.1} parent=51 // pred_fallthru
          _
      $region52: #{_linear_pallas.1} parent=5 // pred_fallthru
        _
    $region6: #{_linear_pallas.1} parent=1 // loop_footer
      %s19 = sadd.s32 1, %s15
    $region7: #{_linear_pallas.1} parent=1 // loop_footer_branch
      %14 = sbr.rel target = $region3
    $region8: #{_linear_pallas.1} parent=1 // loop_exit
      _
    %905 = vsyncpa [#allocation4], 1
    %s906 = scalar_lea.sflag [#allocation4], 1
    %907 = vsyncpa %s906, 1
    %908 = vsyncpa [#allocation7], 1
    %s909 = scalar_lea.sflag [#allocation7], 1
    %910 = vsyncpa %s909, 1
    %911 = vsyncpa [#allocation5], 1
    %s912 = scalar_lea.sflag [#allocation5], 1
    %913 = vsyncpa %s912, 1

</llo_original>
